<compile_context>
chip_gen: v6e
topology: v6e:2x2x1
jax: 0.10.0
libtpu: 0.0.40
codegen_flags: <defaults>
</compile_context>

<pallas_src>
from math import sqrt

import jax
import jax.numpy as jnp
from jax.experimental import pallas as pl
from jax.experimental.pallas import tpu as pltpu


# ----------------------------------------------------------------------------
# Helpers
# ----------------------------------------------------------------------------
_VMEM_LIMIT_CACHE = None


def _vmem_limit_bytes():
    """min(64 MiB, 3/4 of physical VMEM) -> 48 MiB on v7x, 64 MiB on v5e/v6e."""
    global _VMEM_LIMIT_CACHE
    if _VMEM_LIMIT_CACHE is None:
        try:
            phys = pltpu.get_tpu_info().vmem_capacity_bytes
        except Exception:
            phys = 64 * 1024 * 1024          # conservative (v7x-sized) fallback
        _VMEM_LIMIT_CACHE = min(64 * 1024 * 1024, (phys * 3) // 4)
    return _VMEM_LIMIT_CACHE


def _round_up(x, m):
    return ((x + m - 1) // m) * m


def _pick_tile(dim, pref, align):
    """Return (tile, padded_dim).

    Small dims (<= pref) use a full-extent block (always legal per the (8,128)
    rule).  Larger dims use an aligned `pref` tile with a cdiv grid; the
    wrapper zero-pads the array up to `padded_dim` and slices the result back.
    """
    assert pref % align == 0
    if dim <= pref:
        return dim, dim
    return pref, _round_up(dim, pref)


# ----------------------------------------------------------------------------
# Tiled linear kernel:  y = x @ w_t + b
#   x: (M, K) bf16, w_t: (K, N) bf16 (pre-transposed), b: (1, N) f32
# ----------------------------------------------------------------------------
def _linear_kernel(x_ref, w_ref, b_ref, o_ref, acc_ref):
    @pl.when(pl.program_id(2) == 0)
    def _():
        acc_ref[...] = jnp.zeros_like(acc_ref)

    acc_ref[...] += jnp.dot(x_ref[...], w_ref[...],
                            preferred_element_type=jnp.float32)

    @pl.when(pl.program_id(2) == pl.num_programs(2) - 1)
    def _():
        o_ref[...] = (acc_ref[...] + b_ref[...]).astype(o_ref.dtype)


def linear_pallas(x2d, w_t, b_row, out_dtype=None,
                  *, tm_pref=512, tn_pref=512, tk_pref=512):
    """x2d: (M, K); w_t: (K, N); b_row: (1, N) -> (M, N)."""
    out_dtype = out_dtype or x2d.dtype
    m, k = x2d.shape
    k2, n = w_t.shape
    assert k2 == k

    tm, mp = _pick_tile(m, tm_pref, 8)      # sublane-aligned row tile
    tk, kp = _pick_tile(k, tk_pref, 128)    # lane-aligned contraction tile
    tn, np_ = _pick_tile(n, tn_pref, 128)   # lane-aligned output tile

    if (mp, kp) != (m, k):
        x2d = jnp.pad(x2d, ((0, mp - m), (0, kp - k)))
    if (kp, np_) != (k, n):
        w_t = jnp.pad(w_t, ((0, kp - k), (0, np_ - n)))
    if np_ != n:
        b_row = jnp.pad(b_row, ((0, 0), (0, np_ - n)))

    grid = (mp // tm, np_ // tn, kp // tk)

    out = pl.pallas_call(
        _linear_kernel,
        out_shape=jax.ShapeDtypeStruct((mp, np_), out_dtype),
        grid_spec=pltpu.PrefetchScalarGridSpec(
            num_scalar_prefetch=0,
            grid=grid,
            in_specs=[
                pl.BlockSpec((tm, tk), lambda i, j, kk: (i, kk)),
                pl.BlockSpec((tk, tn), lambda i, j, kk: (kk, j)),
                pl.BlockSpec((1, tn), lambda i, j, kk: (0, j)),
            ],
            out_specs=pl.BlockSpec((tm, tn), lambda i, j, kk: (i, j)),
            scratch_shapes=[pltpu.VMEM((tm, tn), jnp.float32)],
        ),
        compiler_params=pltpu.CompilerParams(
            dimension_semantics=("parallel", "parallel", "arbitrary"),
            vmem_limit_bytes=_vmem_limit_bytes(),
        ),
    )(x2d, w_t, b_row)

    if (mp, np_) != (m, n):
        out = out[:m, :n]
    return out


# ----------------------------------------------------------------------------
# Fused attention ("reprogramming") + output projection, grid = (rows, d_llm)
# ----------------------------------------------------------------------------
def _make_attn_kernel(n_heads, d_head):
    def kernel(q_ref, k_ref, v_ref, wo_ref, bo_ref, o_ref, attn_ref):
        # Attention for this row tile is computed once (at d_llm-tile index 0)
        # and cached in VMEM scratch; reused for all d_llm tiles.
        @pl.when(pl.program_id(1) == 0)
        def _():
            q = q_ref[...]            # (tr, H*E) bf16, 1/sqrt(E) folded in Wq/bq
            k = k_ref[...]            # (S,  H*E) bf16, resident across the grid
            v = v_ref[...]            # (S,  H*E) bf16, resident across the grid
            heads = []
            for h in range(n_heads):  # static unroll over heads
                lo = h * d_head
                qh = q[:, lo:lo + d_head]
                kh = k[:, lo:lo + d_head]
                vh = v[:, lo:lo + d_head]
                # scores = qh @ kh^T without materializing a transpose, f32 acc
                s = jax.lax.dot_general(qh, kh, (((1,), (1,)), ((), ())),
                                        preferred_element_type=jnp.float32)
                m = jnp.max(s, axis=-1, keepdims=True)
                e = jnp.exp(s - m)
                p = e * pl.reciprocal(jnp.sum(e, axis=-1, keepdims=True),
                                      approx=True)
                heads.append(jnp.dot(p.astype(jnp.bfloat16), vh,
                                     preferred_element_type=jnp.float32))
            attn_ref[...] = jnp.concatenate(heads, axis=-1).astype(attn_ref.dtype)

        # De-fused output projection: one big H*E-contraction matmul per tile.
        o_ref[...] = (jnp.dot(attn_ref[...], wo_ref[...],
                              preferred_element_type=jnp.float32)
                      + bo_ref[...]).astype(o_ref.dtype)

    return kernel


def reprogramming_attention_pallas(q, k, v, wo_t, bo_row, n_heads, d_head,
                                   *, tr_pref=256, tn_pref=512):
    """q: (R, H*E) bf16; k, v: (S, H*E) bf16; wo_t: (H*E, d_llm) bf16;
    bo_row: (1, d_llm) f32 -> (R, d_llm) f32."""
    R, HE = q.shape
    S = k.shape[0]
    d_llm = wo_t.shape[1]

    tr, rp = _pick_tile(R, tr_pref, 8)
    tn, npad = _pick_tile(d_llm, tn_pref, 128)

    if rp != R:
        q = jnp.pad(q, ((0, rp - R), (0, 0)))
    if npad != d_llm:
        wo_t = jnp.pad(wo_t, ((0, 0), (0, npad - d_llm)))
        bo_row = jnp.pad(bo_row, ((0, 0), (0, npad - d_llm)))

    grid = (rp // tr, npad // tn)

    out = pl.pallas_call(
        _make_attn_kernel(n_heads, d_head),
        out_shape=jax.ShapeDtypeStruct((rp, npad), jnp.float32),
        grid_spec=pltpu.PrefetchScalarGridSpec(
            num_scalar_prefetch=0,
            grid=grid,
            in_specs=[
                pl.BlockSpec((tr, HE), lambda i, j: (i, 0)),   # q row tile
                pl.BlockSpec((S, HE), lambda i, j: (0, 0)),    # K resident
                pl.BlockSpec((S, HE), lambda i, j: (0, 0)),    # V resident
                pl.BlockSpec((HE, tn), lambda i, j: (0, j)),   # Wo d_llm tile
                pl.BlockSpec((1, tn), lambda i, j: (0, j)),    # bo d_llm tile
            ],
            out_specs=pl.BlockSpec((tr, tn), lambda i, j: (i, j)),
            scratch_shapes=[pltpu.VMEM((tr, HE), jnp.bfloat16)],
        ),
        compiler_params=pltpu.CompilerParams(
            # d_llm axis must be "arbitrary": the scratch attention cache is
            # written at j == 0 and consumed at j > 0 for the same row tile.
            dimension_semantics=("parallel", "arbitrary"),
            vmem_limit_bytes=_vmem_limit_bytes(),
        ),
    )(q, k, v, wo_t, bo_row)

    if (rp, npad) != (R, d_llm):
        out = out[:R, :d_llm]
    return out


# ----------------------------------------------------------------------------
# Module: ReprogrammingLayer
# ----------------------------------------------------------------------------
class ReprogrammingLayerPallas:
    def __init__(self, d_model, n_heads, d_keys=None, d_llm=None, key=None):
        d_keys = d_keys or d_model // n_heads
        self.d_model = d_model
        self.n_heads = n_heads
        self.d_keys = d_keys
        self.d_llm = d_llm

        key = key if key is not None else jax.random.PRNGKey(0)
        ks = jax.random.split(key, 8)
        dkh = d_keys * n_heads

        def init_linear(kw, kb, fan_in, fan_out):
            bound = 1.0 / sqrt(fan_in)
            w = jax.random.uniform(kw, (fan_out, fan_in), jnp.float32, -bound, bound)
            b = jax.random.uniform(kb, (fan_out,), jnp.float32, -bound, bound)
            return w, b

        # f32 master params (PyTorch (out, in) layout) — used by the reference
        self.wq, self.bq = init_linear(ks[0], ks[1], d_model, dkh)
        self.wk, self.bk = init_linear(ks[2], ks[3], d_llm, dkh)
        self.wv, self.bv = init_linear(ks[4], ks[5], d_llm, dkh)
        self.wo, self.bo = init_linear(ks[6], ks[7], dkh, d_llm)

        # Kernel-ready params: pre-transposed once, bf16 weights (MXU bf16
        # path, half the DMA bytes), f32 biases, 1/sqrt(E) folded into Wq/bq.
        scale = 1.0 / sqrt(d_keys)
        self.wq_t = (self.wq * scale).T.astype(jnp.bfloat16)        # (d_model, H*E)
        self.bq_row = (self.bq * scale).reshape(1, dkh)              # f32
        self.wk_t = self.wk.T.astype(jnp.bfloat16)                   # (d_llm, H*E)
        self.bk_row = self.bk.reshape(1, dkh)
        self.wv_t = self.wv.T.astype(jnp.bfloat16)                   # (d_llm, H*E)
        self.bv_row = self.bv.reshape(1, dkh)
        self.wo_t = self.wo.T.astype(jnp.bfloat16)                   # (H*E, d_llm)
        self.bo_row = self.bo.reshape(1, d_llm)
        # Fused K/V projection weights for the source==value call pattern.
        self.wkv_t = jnp.concatenate([self.wk_t, self.wv_t], axis=1)  # (d_llm, 2*H*E)
        self.bkv_row = jnp.concatenate([self.bk_row, self.bv_row], axis=1)

    def __call__(self, target_embedding, source_embedding, value_embedding):
        B, L, _ = target_embedding.shape
        H, E = self.n_heads, self.d_keys
        HE = H * E

        # Projections: bf16 operands, f32 accumulation, bf16 outputs.
        tgt = target_embedding.reshape(B * L, self.d_model).astype(jnp.bfloat16)
        q = linear_pallas(tgt, self.wq_t, self.bq_row,
                          out_dtype=jnp.bfloat16)                    # (B*L, H*E)

        if source_embedding is value_embedding:
            # TimeLLM call pattern: one fused K/V projection (lane-dense out).
            src = source_embedding.astype(jnp.bfloat16)
            kv = linear_pallas(src, self.wkv_t, self.bkv_row,
                               out_dtype=jnp.bfloat16)               # (S, 2*H*E)
            k, v = kv[:, :HE], kv[:, HE:]
        else:
            k = linear_pallas(source_embedding.astype(jnp.bfloat16),
                              self.wk_t, self.bk_row, out_dtype=jnp.bfloat16)
            v = linear_pallas(value_embedding.astype(jnp.bfloat16),
                              self.wv_t, self.bv_row, out_dtype=jnp.bfloat16)

        # Fused attention + output projection over (row, d_llm) tiles.
        out2d = reprogramming_attention_pallas(q, k, v, self.wo_t, self.bo_row,
                                               H, E)                 # (B*L, d_llm) f32
        return out2d.reshape(B, L, self.d_llm)

    # Pure-JAX f32 reference mirroring the PyTorch module (eval mode).
    def reference(self, target_embedding, source_embedding, value_embedding):
        B, L, _ = target_embedding.shape
        S, _ = source_embedding.shape
        H, E = self.n_heads, self.d_keys
        q = (target_embedding @ self.wq.T + self.bq).reshape(B, L, H, E)
        k = (source_embedding @ self.wk.T + self.bk).reshape(S, H, E)
        v = (value_embedding @ self.wv.T + self.bv).reshape(S, H, E)
        scale = 1.0 / sqrt(E)
        scores = jnp.einsum('blhe,she->bhls', q, k)
        A = jax.nn.softmax(scale * scores, axis=-1)
        out = jnp.einsum('bhls,she->blhe', A, v).reshape(B, L, H * E)
        return out @ self.wo.T + self.bo


if __name__ == "__main__":
    # Small shapes consistent with the module's forward.
    B, L, S = 2, 8, 16
    d_model, n_heads, d_llm = 32, 4, 48          # d_keys = 8

    root = jax.random.PRNGKey(0)
    k_params, k_t, k_s, k_v = jax.random.split(root, 4)

    layer = ReprogrammingLayerPallas(d_model, n_heads, d_llm=d_llm, key=k_params)

    target_embedding = jax.random.normal(k_t, (B, L, d_model), jnp.float32)
    source_embedding = jax.random.normal(k_s, (S, d_llm), jnp.float32)
    value_embedding = jax.random.normal(k_v, (S, d_llm), jnp.float32)

    # bf16 matmul operands + approx reciprocal -> loosened tolerance vs f32 ref.
    TOL = dict(atol=5e-2, rtol=5e-2)

    # 1) TimeLLM call pattern (source == value) -> fused K/V projection path.
    out_fused = jax.block_until_ready(
        layer(target_embedding, source_embedding, source_embedding))
    ref_fused = layer.reference(target_embedding, source_embedding, source_embedding)
    assert out_fused.shape == (B, L, d_llm)
    assert jnp.allclose(out_fused, ref_fused, **TOL), "mismatch (fused KV path)"

    # 2) Distinct source / value tensors -> separate K and V projections.
    out_sep = jax.block_until_ready(
        layer(target_embedding, source_embedding, value_embedding))
    ref_sep = layer.reference(target_embedding, source_embedding, value_embedding)
    assert out_sep.shape == (B, L, d_llm)
    assert jnp.allclose(out_sep, ref_sep, **TOL), "mismatch (separate KV path)"

    print("KERNEL_OK")
</pallas_src>

<mosaic_0001>
module attributes {stable_mosaic.version = 11 : i64} {
  func.func @_linear_kernel(%arg0: i32, %arg1: i32, %arg2: i32, %arg3: memref<16x32xbf16, #tpu.memory_space<vmem>>, %arg4: memref<32x32xbf16, #tpu.memory_space<vmem>>, %arg5: memref<1x32xf32, #tpu.memory_space<vmem>>, %arg6: memref<16x32xbf16, #tpu.memory_space<vmem>>, %arg7: memref<16x32xf32, #tpu.memory_space<vmem>>) attributes {dimension_semantics = [#tpu.dimension_semantics<parallel>, #tpu.dimension_semantics<parallel>, #tpu.dimension_semantics<arbitrary>], iteration_bounds = array<i64: 1, 1, 1>, scalar_prefetch = 0 : i64, scratch_operands = 1 : i64, tpu.core_type = #tpu.core_type<tc>, window_params = [{transform_indices = @transform_0, window_bounds = array<i64: 16, 32>}, {transform_indices = @transform_1, window_bounds = array<i64: 32, 32>}, {transform_indices = @transform_2, window_bounds = array<i64: 1, 32>}, {transform_indices = @transform_3, window_bounds = array<i64: 16, 32>}]} {
    %c0_i32 = arith.constant 0 : i32
    %0 = arith.cmpi eq, %arg2, %c0_i32 : i32
    %1 = arith.extui %0 : i1 to i32
    %c0_i32_0 = arith.constant 0 : i32
    %2 = arith.cmpi ne, %1, %c0_i32_0 : i32
    scf.if %2 {
      %cst_10 = arith.constant 0.000000e+00 : f32
      %12 = vector.broadcast %cst_10 : f32 to vector<16x32xf32>
      %c0_11 = arith.constant 0 : index
      %c0_12 = arith.constant 0 : index
      %13 = vector.load %arg7[%c0_11, %c0_12] : memref<16x32xf32, #tpu.memory_space<vmem>>, vector<16x32xf32>
      tpu.vector_store %arg7[%c0_11, %c0_12], %12 {strides = array<i32>} : memref<16x32xf32, #tpu.memory_space<vmem>>, vector<16x32xf32>,
    } else {
    }
    %c0 = arith.constant 0 : index
    %c0_1 = arith.constant 0 : index
    %3 = vector.load %arg7[%c0, %c0_1] : memref<16x32xf32, #tpu.memory_space<vmem>>, vector<16x32xf32>
    %c0_2 = arith.constant 0 : index
    %c0_3 = arith.constant 0 : index
    %4 = vector.load %arg3[%c0_2, %c0_3] : memref<16x32xbf16, #tpu.memory_space<vmem>>, vector<16x32xbf16>
    %c0_4 = arith.constant 0 : index
    %c0_5 = arith.constant 0 : index
    %5 = vector.load %arg4[%c0_4, %c0_5] : memref<32x32xbf16, #tpu.memory_space<vmem>>, vector<32x32xbf16>
    %cst = arith.constant dense<0.000000e+00> : vector<16x32xf32>
    %6 = tpu.matmul %4, %5, %cst {dimension_numbers = #tpu.dot_dimension_numbers<[1], [0], [0], [1], [0, 0, 1, 1], [], []>} : vector<16x32xbf16>, vector<32x32xbf16>, vector<16x32xf32> -> vector<16x32xf32>
    %7 = arith.addf %3, %6 : vector<16x32xf32>
    %c0_6 = arith.constant 0 : index
    %c0_7 = arith.constant 0 : index
    %8 = vector.load %arg7[%c0_6, %c0_7] : memref<16x32xf32, #tpu.memory_space<vmem>>, vector<16x32xf32>
    tpu.vector_store %arg7[%c0_6, %c0_7], %7 {strides = array<i32>} : memref<16x32xf32, #tpu.memory_space<vmem>>, vector<16x32xf32>,
    %c0_i32_8 = arith.constant 0 : i32
    %9 = arith.cmpi eq, %arg2, %c0_i32_8 : i32
    %10 = arith.extui %9 : i1 to i32
    %c0_i32_9 = arith.constant 0 : i32
    %11 = arith.cmpi ne, %10, %c0_i32_9 : i32
    scf.if %11 {
      %c0_10 = arith.constant 0 : index
      %c0_11 = arith.constant 0 : index
      %12 = vector.load %arg7[%c0_10, %c0_11] : memref<16x32xf32, #tpu.memory_space<vmem>>, vector<16x32xf32>
      %c0_12 = arith.constant 0 : index
      %c0_13 = arith.constant 0 : index
      %13 = vector.load %arg5[%c0_12, %c0_13] : memref<1x32xf32, #tpu.memory_space<vmem>>, vector<1x32xf32>
      %14 = vector.broadcast %13 : vector<1x32xf32> to vector<16x32xf32>
      %15 = arith.addf %12, %14 : vector<16x32xf32>
      %16 = arith.truncf %15 : vector<16x32xf32> to vector<16x32xbf16>
      %c0_14 = arith.constant 0 : index
      %c0_15 = arith.constant 0 : index
      %17 = vector.load %arg6[%c0_14, %c0_15] : memref<16x32xbf16, #tpu.memory_space<vmem>>, vector<16x32xbf16>
      tpu.vector_store %arg6[%c0_14, %c0_15], %16 {strides = array<i32>} : memref<16x32xbf16, #tpu.memory_space<vmem>>, vector<16x32xbf16>,
    } else {
    }
    return
  }
  func.func @transform_0(%arg0: i32, %arg1: i32, %arg2: i32) -> (i32, i32) {
    %c0_i32 = arith.constant 0 : i32
    return %arg0, %arg2 : i32, i32
  }
  func.func @transform_1(%arg0: i32, %arg1: i32, %arg2: i32) -> (i32, i32) {
    %c0_i32 = arith.constant 0 : i32
    return %arg2, %arg1 : i32, i32
  }
  func.func @transform_2(%arg0: i32, %arg1: i32, %arg2: i32) -> (i32, i32) {
    %c0_i32 = arith.constant 0 : i32
    %c0_i32_0 = arith.constant 0 : i32
    return %c0_i32, %arg1 : i32, i32
  }
  func.func @transform_3(%arg0: i32, %arg1: i32, %arg2: i32) -> (i32, i32) {
    %c0_i32 = arith.constant 0 : i32
    return %arg0, %arg1 : i32, i32
  }
}

</mosaic_0001>

<llo_original>
// kernel: tpu_custom_call.1
$region0: #{tpu_custom_call.1}
  #allocation0 [shape = 'u32[]', space=smem, size = 0x4, offset = 0x4, fixed_abs, tag = 'smem constant byte address 0x4 - core index']
  #allocation1 [shape = 'u32[144,128]{1,0:T(1,128)}', space=vmem, size = 0x12000, scoped, tag = 'internal scratch']
  #allocation2 [shape = 'f32[16,32]{1,0:T(8,128)}', space=vmem, size = 0x2000, scoped, tag = 'scratch operand']
  %s0 = inlined_call_operand.hbm [shape: bf16[16,32], index: 0, kind: input, shape index: {}]
  %s1 = inlined_call_operand.hbm [shape: bf16[32,32], index: 1, kind: input, shape index: {}]
  %s2 = inlined_call_operand.vmem [shape: f32[1,32], index: 2, kind: input, shape index: {}]
  %s3 = inlined_call_operand.hbm [shape: bf16[16,32], index: 3, kind: output, shape index: {}]
  %s4 = sld [smem:[#allocation0]]
  $region38: #{tpu_custom_call.1} parent=0
    _
  %s6 = ssub.s32 1, %s4
  %s7 = scalar_select 0, %s6, %s4
  $region1: #{tpu_custom_call.1} parent=0
    #allocation3 [shape = 'u8[4096]{0}', space=vmem, size = 0x1000, scoped, tag = 'input window, operand 0, single buffered']
    #allocation4 [shape = 's32[1]{0}', space=sflag, size = 0x4, scoped, tag = 'scoped memory for tpu_custom_call.1']
    #allocation5 [shape = 's32[1]{0}', space=sflag, size = 0x4, scoped, tag = 'scoped memory for tpu_custom_call.1']
    #allocation6 [shape = 'u8[8192]{0}', space=vmem, size = 0x2000, scoped, tag = 'input window, operand 1, single buffered']
    #allocation7 [shape = 's32[1]{0}', space=sflag, size = 0x4, scoped, tag = 'scoped memory for tpu_custom_call.1']
    #allocation8 [shape = 'u8[4096]{0}', space=vmem, size = 0x1000, scoped, tag = 'output window, operand 0, single buffered']
    %8 = vsyncpa [#allocation4], 0
    %9 = vsyncpa [#allocation7], 0
    %10 = vsyncpa [#allocation5], 0
    // Predicated region
    $region2: #{tpu_custom_call.1} parent=1 // pred_check
      _
    $region3: #{tpu_custom_call.1} parent=1 // pred_check_branch
      %12 = sbr.rel (0) target = $region5
    $region4: #{tpu_custom_call.1} parent=1 // pred_region
      %s14 = ssub.s32 128, 128
      %15 = vsyncadd [#allocation4], %s14
      %s16 = sshll.u32 [#allocation3], 4
      %s17 = int_to_ptr.vmem [resolvable:$true] %s16
      %22 = dma.hbm_to_vmem [thread:$0]  %s0, 128, %s17, [#allocation4], 64, 64, 4
    $region5: #{tpu_custom_call.1} parent=1 // pred_fallthru
      _
    // Predicated region
    $region6: #{tpu_custom_call.1} parent=1 // pred_check
      _
    $region7: #{tpu_custom_call.1} parent=1 // pred_check_branch
      %24 = sbr.rel (0) target = $region9
    $region8: #{tpu_custom_call.1} parent=1 // pred_region
      %s26 = ssub.s32 256, 256
      %27 = vsyncadd [#allocation7], %s26
      %s28 = sshll.u32 [#allocation6], 4
      %s29 = int_to_ptr.vmem [resolvable:$true] %s28
      %34 = dma.hbm_to_vmem [thread:$0]  %s1, 256, %s29, [#allocation7], 64, 64, 4
    $region9: #{tpu_custom_call.1} parent=1 // pred_fallthru
      _
    // Predicated region
    $region10: #{tpu_custom_call.1} parent=1 // pred_check
      _
    $region11: #{tpu_custom_call.1} parent=1 // pred_check_branch
      %36 = sbr.rel (0) target = $region13
    $region12: #{tpu_custom_call.1} parent=1 // pred_region
      _
    $region13: #{tpu_custom_call.1} parent=1 // pred_fallthru
      _
    // Predicated region
    $region14: #{tpu_custom_call.1} parent=1 // pred_check
      _
    $region15: #{tpu_custom_call.1} parent=1 // pred_check_branch
      %38 = sbr.rel (0) target = $region17
    $region16: #{tpu_custom_call.1} parent=1 // pred_region
      %39 = dma.done [#allocation4], 128
    $region17: #{tpu_custom_call.1} parent=1 // pred_fallthru
      _
    // Predicated region
    $region18: #{tpu_custom_call.1} parent=1 // pred_check
      _
    $region19: #{tpu_custom_call.1} parent=1 // pred_check_branch
      %41 = sbr.rel (0) target = $region21
    $region20: #{tpu_custom_call.1} parent=1 // pred_region
      %42 = dma.done [#allocation7], 256
    $region21: #{tpu_custom_call.1} parent=1 // pred_fallthru
      _
    %p44 = scmp.eq.s32.totalorder 0, 0
    // Predicated region
    $region22: #{tpu_custom_call.1} parent=1 // pred_check
      %p45 = pneg %p44
    $region23: #{tpu_custom_call.1} parent=1 // pred_check_branch
      %47 = sbr.rel (%p45) target = $region25
    $region24: #{tpu_custom_call.1} parent=1 // pred_region
      %vm48 = vcmask 261120
      %49 = vst.msk [vmem:[#allocation2] sm:$0xff] %vm48, 0.0
      %50 = vst.msk [vmem:[#allocation2 + $0x8] sm:$0xff] %vm48, 0.0
    $region25: #{tpu_custom_call.1} parent=1 // pred_fallthru
      _
    %v51 = vld [vmem:[#allocation2] sm:$0xff]
    %v52 = vld [vmem:[#allocation2 + $0x8] sm:$0xff]
    %v53 = vld [vmem:[#allocation3] sm:$0xf]
    %v54 = vld [vmem:[#allocation3 + $0x4] sm:$0xf]
    %v55 = vld [vmem:[#allocation6] sm:$0xf]
    %v56 = vld [vmem:[#allocation6 + $0x4] sm:$0xf]
    %v57 = vld [vmem:[#allocation6 + $0x8] sm:$0xf]
    %v58 = vld [vmem:[#allocation6 + $0xc] sm:$0xf]
    %v61 = vunpack.c.l.b16 %v53
    %v62 = vunpack.c.l.b16 %v54
    %v63 = vpack.c.b16 %v62, %v61
    %v68 = vunpack.c.l.b16 %v55
    %v69 = vunpack.c.l.b16 %v56
    %v70 = vunpack.c.l.b16 %v57
    %v71 = vunpack.c.l.b16 %v58
    %v72 = vpack.c.b16 %v69, %v68
    %v73 = vpack.c.b16 %v71, %v70
    %vm76 = vcmask 261120
    %v78 = vsel %vm76, %v63, 0
    %80 = vmatprep.subr.bf16.mxu0 0
    %81 = vmatpush1.bf16.msra.mxu0 0
    %82 = vmatprep.subr.bf16.mxu0 0
    %83 = vmatpush1.bf16.msra.mxu0 0
    %84 = vmatprep.subr.bf16.mxu0 0
    %85 = vmatpush1.bf16.msra.mxu0 0
    %86 = vmatprep.subr.bf16.mxu0 0
    %87 = vmatpush1.bf16.msra.mxu0 0
    %88 = vmatprep.subr.bf16.mxu0 0
    %89 = vmatpush1.bf16.msra.mxu0 0
    %90 = vmatprep.subr.bf16.mxu0 0
    %91 = vmatpush1.bf16.msra.mxu0 0
    %92 = vmatprep.subr.bf16.mxu0 0
    %93 = vmatpush1.bf16.msra.mxu0 %v73
    %94 = vmatprep.subr.bf16.mxu0 0
    %95 = vmatpush1.bf16.msra.mxu0 %v72
    %96 = vmatprep.subr.bf16.mxu0 0
    %97 = vmatpush2.bf16.msra.mxu0 0
    %98 = vmatprep.subr.bf16.mxu0 0
    %99 = vmatpush2.bf16.msra.mxu0 0
    %100 = vmatprep.subr.bf16.mxu0 0
    %101 = vmatpush2.bf16.msra.mxu0 0
    %102 = vmatprep.subr.bf16.mxu0 0
    %103 = vmatpush2.bf16.msra.mxu0 0
    %104 = vmatprep.subr.bf16.mxu0 0
    %105 = vmatpush2.bf16.msra.mxu0 0
    %106 = vmatprep.subr.bf16.mxu0 0
    %107 = vmatpush2.bf16.msra.mxu0 0
    %108 = vmatprep.subr.bf16.mxu0 0
    %109 = vmatpush2.bf16.msra.mxu0 0
    %110 = vmatprep.subr.bf16.mxu0 0
    %111 = vmatpush2.bf16.msra.mxu0 0
    %112 = vmatprep.mubr.bf16.mxu0 0
    %113 = vmatmul.mubr.bf16.gmra.mxu0 %v78
    %v114 = vpop.f32.mrf.mxu0
    %v115 = vadd.f32 0.0, %v114
    %v116 = vpop.f32.mrf.mxu0
    %v117 = vpop.f32.mrf.mxu0
    %v118 = vadd.f32 0.0, %v117
    %v119 = vpop.f32.mrf.mxu0
    %120 = vdwg.mxu0
    %v121 = vadd.f32 %v51, %v115
    %v122 = vadd.f32 %v52, %v118
    %123 = vst.msk [vmem:[#allocation2] sm:$0xff] %vm76, %v121
    %124 = vst.msk [vmem:[#allocation2 + $0x8] sm:$0xff] %vm76, %v122
    // Predicated region
    $region26: #{tpu_custom_call.1} parent=1 // pred_check
      %p125 = pneg %p44
    $region27: #{tpu_custom_call.1} parent=1 // pred_check_branch
      %127 = sbr.rel (%p125) target = $region29
    $region28: #{tpu_custom_call.1} parent=1 // pred_region
      %v128 = vld [vmem:[#allocation2] sm:$0xff]
      %v129 = vld [vmem:[#allocation2 + $0x8] sm:$0xff]
      %v130 = vld [vmem:[%s2] sm:$0x1]
      %v132 = vlaneseq
      %v133 = vshrl.u32 %v132, 7
      %v134 = vsub.s32 0, %v133
      %v135 = vrot.slane %v130, %v134
      %v137 = vadd.f32 %v128, %v135
      %v138 = vadd.f32 %v129, %v135
      %v139 = vpack.c.bf16 %v138, %v137
      %v141 = vunpack.c.l.b16 %v139
      %v142 = vunpack.c.h.b16 %v139
      %v143 = vpack.c.b16 %v141, %v141
      %v144 = vpack.c.b16 %v142, %v142
      %vm147 = vcmask 257024
      %148 = vst.msk [vmem:[#allocation8] sm:$0xf] %vm147, %v143
      %149 = vst.msk [vmem:[#allocation8 + $0x4] sm:$0xf] %vm147, %v144
    $region29: #{tpu_custom_call.1} parent=1 // pred_fallthru
      _
    // Predicated region
    $region30: #{tpu_custom_call.1} parent=1 // pred_check
      _
    $region31: #{tpu_custom_call.1} parent=1 // pred_check_branch
      %151 = sbr.rel (0) target = $region33
    $region32: #{tpu_custom_call.1} parent=1 // pred_region
      %s153 = ssub.s32 128, 128
      %154 = vsyncadd [#allocation5], %s153
      %s155 = sshll.u32 [#allocation8], 4
      %s156 = int_to_ptr.vmem [resolvable:$true] %s155
      %161 = dma.vmem_to_hbm [thread:$0]  %s156, 128, %s3, [#allocation5], 64, 64, 4
    $region33: #{tpu_custom_call.1} parent=1 // pred_fallthru
      _
    // Predicated region
    $region34: #{tpu_custom_call.1} parent=1 // pred_check
      _
    $region35: #{tpu_custom_call.1} parent=1 // pred_check_branch
      %163 = sbr.rel (0) target = $region37
    $region36: #{tpu_custom_call.1} parent=1 // pred_region
      %164 = dma.done [#allocation5], 128
    $region37: #{tpu_custom_call.1} parent=1 // pred_fallthru
      _
    %165 = vsyncpa [#allocation4], 1
    %166 = vsyncpa [#allocation7], 1
    %167 = vsyncpa [#allocation5], 1

</llo_original>
